<compile_context>
chip_gen: v6e
topology: v6e:2x2x1
jax: 0.10.0
libtpu: 0.0.40
codegen_flags: <defaults>
</compile_context>

<pallas_src>
import functools

import jax
import jax.numpy as jnp
from jax import lax
from jax.experimental import pallas as pl
from jax.experimental.pallas import tpu as pltpu

ALPHA = 0.75
GAMMA = 2
LANES = 128
SUBLANES = 8
MAX_BLOCK_ROWS = 4096      # (4096, 128) f32 block = 2 MiB; safe on v5e/v6e/v7x


def _round_up(a, b):
    return ((a + b - 1) // b) * b


def _row_align(dtype):
    # Sublane packing for the second-to-last dim.
    return {4: 8, 2: 16, 1: 32}.get(jnp.dtype(dtype).itemsize, 8)


def _focal_kernel(x_ref, t_ref, o_ref, *,
                  alpha, gamma, n, block_rows, steps, has_tail):
    c = pl.program_id(0)   # partition axis (per-core on multi-TC chips)
    j = pl.program_id(1)   # reduction axis

    @pl.when(j == 0)
    def _init():
        o_ref[...] = jnp.zeros_like(o_ref)

    x = x_ref[...]
    if x.dtype != jnp.float32:
        x = x.astype(jnp.float32)
    t = t_ref[...]
    if t.dtype != jnp.float32:
        t = t.astype(jnp.float32)

    # Numerically-stable BCE-with-logits (matches F.binary_cross_entropy_with_logits):
    #   bce = max(x, 0) - x*t + log1p(exp(-|x|))
    e = jnp.exp(-jnp.abs(x))
    bce = jnp.maximum(x, 0.0) - x * t + jnp.log1p(e)
    prob = jnp.exp(-bce)
    one_minus_p = 1.0 - prob
    if gamma == 2:
        mod = one_minus_p * one_minus_p          # explicit VPU multiply
    else:
        mod = one_minus_p ** gamma
    loss = alpha * mod * bce

    block_elems = block_rows * LANES

    def _reduce_add(v):
        # (block_rows, 128) -> (R, 8, 128) is tile-aligned (view); summing over
        # the leading axis is plain vreg adds into the resident (8,128) output.
        o_ref[...] += jnp.sum(
            jnp.reshape(v, (block_rows // SUBLANES, SUBLANES, LANES)), axis=0)

    if has_tail:
        # Unclamped logical tile index: duplicated round-up tiles get base >= n
        # and are fully masked; partial edge tiles mask DMA-clamped garbage.
        tile_idx = c * steps + j
        base = tile_idx * block_elems
        tile_is_full = (base + block_elems) <= n

        @pl.when(tile_is_full)
        def _acc_full():
            _reduce_add(loss)

        @pl.when(jnp.logical_not(tile_is_full))
        def _acc_tail():
            row_ids = lax.broadcasted_iota(jnp.int32, (block_rows, LANES), 0)
            lane_ids = lax.broadcasted_iota(jnp.int32, (block_rows, LANES), 1)
            gidx = base + row_ids * LANES + lane_ids
            _reduce_add(jnp.where(gidx < n, loss, 0.0))
    else:
        _reduce_add(loss)


def binary_focal_loss(logits, targets, alpha=ALPHA, gamma=GAMMA,
                      reduction="mean", num_partitions=1,
                      max_block_rows=MAX_BLOCK_ROWS):
    """Pallas TPU implementation of BinaryFocalLoss.forward."""
    x = jnp.reshape(logits, (-1,))          # torch .squeeze() only drops size-1
    t = jnp.reshape(targets, (-1,))         # dims; element order is identical.
    assert x.size == t.size, (logits.shape, targets.shape)
    n = int(x.size)
    assert n < 2**31, "int32 element indexing in-kernel; n too large"

    if t.dtype == jnp.bool_:
        t = t.astype(jnp.int8)              # keep the stream 1 byte/elem

    # Only pad to the next multiple of 128 lanes (no copy at all when aligned).
    rem = n % LANES
    if rem:
        x = jnp.pad(x, (0, LANES - rem))
        t = jnp.pad(t, (0, LANES - rem))
    rows_total = (n + LANES - 1) // LANES
    x2 = x.reshape(rows_total, LANES)
    t2 = t.reshape(rows_total, LANES)

    # Tile sizing: multiple of both inputs' sublane packing, capped by budget.
    row_align = max(_row_align(x2.dtype), _row_align(t2.dtype))
    block_rows = min(max_block_rows, _round_up(rows_total, row_align))
    block_rows = max(_round_up(block_rows, row_align), row_align)
    block_elems = block_rows * LANES

    num_tiles = pl.cdiv(rows_total, block_rows)              # real tiles
    total_tiles = _round_up(num_tiles, num_partitions)       # grid round-up
    steps = total_tiles // num_partitions
    has_tail = (total_tiles * block_elems) != n
    last_tile = num_tiles - 1
    need_clamp = total_tiles != num_tiles

    def idx_map(c, j):
        tile = c * steps + j
        if need_clamp:
            tile = jnp.minimum(tile, last_tile)   # duplicates masked in-kernel
        return (tile, 0)

    in_spec_x = pl.BlockSpec((block_rows, LANES), idx_map)
    in_spec_t = pl.BlockSpec((block_rows, LANES), idx_map)
    out_spec = pl.BlockSpec((None, SUBLANES, LANES), lambda c, j: (c, 0, 0))

    kernel = functools.partial(
        _focal_kernel, alpha=float(alpha), gamma=gamma, n=n,
        block_rows=block_rows, steps=steps, has_tail=has_tail)

    partials = pl.pallas_call(
        kernel,
        out_shape=jax.ShapeDtypeStruct(
            (num_partitions, SUBLANES, LANES), jnp.float32),
        grid_spec=pltpu.PrefetchScalarGridSpec(
            num_scalar_prefetch=0,
            grid=(num_partitions, steps),
            in_specs=[in_spec_x, in_spec_t],
            out_specs=out_spec,
        ),
        compiler_params=pltpu.CompilerParams(
            dimension_semantics=("parallel", "arbitrary")),
    )(x2, t2)

    total = jnp.sum(partials)
    if reduction == "mean":
        return total / jnp.float32(n)
    return total            # matches the module: anything != 'mean' -> sum


def _reference(logits, targets, alpha=ALPHA, gamma=GAMMA, reduction="mean"):
    x = jnp.reshape(logits, (-1,)).astype(jnp.float32)
    t = jnp.reshape(targets, (-1,)).astype(jnp.float32)
    bce = jnp.maximum(x, 0.0) - x * t + jnp.log1p(jnp.exp(-jnp.abs(x)))
    prob = jnp.exp(-bce)
    loss = alpha * (1.0 - prob) ** gamma * bce
    return jnp.mean(loss) if reduction == "mean" else jnp.sum(loss)


if __name__ == "__main__":
    key = jax.random.PRNGKey(0)
    k1, k2, k3, k4, k5, k6 = jax.random.split(key, 6)

    # 1) Typical binary-segmentation shapes (n % 128 == 0 -> zero-copy path).
    N, H, W = 2, 16, 16
    logits = jax.random.normal(k1, (N, 1, H, W), dtype=jnp.float32)
    targets = (jax.random.uniform(k2, (N, H, W)) > 0.5).astype(jnp.float32)
    loss = jax.block_until_ready(binary_focal_loss(logits, targets))
    ref = _reference(logits, targets)
    assert jnp.allclose(loss, ref, atol=1e-5, rtol=1e-5), (loss, ref)

    # 2) Narrow (bf16) targets, small forced tiles, 2 partitions: exercises
    #    multi-step accumulation, partial edge tile, clamped duplicate tile,
    #    and the 16-row sublane packing for bf16.
    N2, H2, W2 = 2, 48, 48
    logits2 = jax.random.normal(k3, (N2, 1, H2, W2), dtype=jnp.float32)
    targets2 = (jax.random.uniform(k4, (N2, H2, W2)) > 0.5).astype(jnp.bfloat16)
    loss2 = jax.block_until_ready(
        binary_focal_loss(logits2, targets2, max_block_rows=16, num_partitions=2))
    ref2 = _reference(logits2, targets2)
    assert jnp.allclose(loss2, ref2, atol=1e-5, rtol=1e-5), (loss2, ref2)

    # 3) n not a multiple of 128: exercises the minimal lane-pad + tail mask.
    logits3 = jax.random.normal(k5, (1, 1, 5, 7), dtype=jnp.float32)
    targets3 = (jax.random.uniform(k6, (1, 5, 7)) > 0.5).astype(jnp.float32)
    loss3 = jax.block_until_ready(binary_focal_loss(logits3, targets3))
    ref3 = _reference(logits3, targets3)
    assert jnp.allclose(loss3, ref3, atol=1e-5, rtol=1e-5), (loss3, ref3)

    print("KERNEL_OK")
</pallas_src>

<mosaic_0001>
module attributes {stable_mosaic.version = 11 : i64} {
  func.func @_focal_kernel(%arg0: i32, %arg1: i32, %arg2: memref<8x128xf32, #tpu.memory_space<vmem>>, %arg3: memref<8x128xf32, #tpu.memory_space<vmem>>, %arg4: memref<1x8x128xf32, #tpu.memory_space<vmem>>) attributes {dimension_semantics = [#tpu.dimension_semantics<parallel>, #tpu.dimension_semantics<arbitrary>], iteration_bounds = array<i64: 1, 1>, scalar_prefetch = 0 : i64, scratch_operands = 0 : i64, tpu.core_type = #tpu.core_type<tc>, window_params = [{transform_indices = @transform_0, window_bounds = array<i64: 8, 128>}, {transform_indices = @transform_1, window_bounds = array<i64: 8, 128>}, {transform_indices = @transform_2, window_bounds = array<i64: 1, 8, 128>}]} {
    %c0_i32 = arith.constant 0 : i32
    %0 = arith.cmpi eq, %arg1, %c0_i32 : i32
    %1 = arith.extui %0 : i1 to i32
    %c0_i32_0 = arith.constant 0 : i32
    %2 = arith.cmpi ne, %1, %c0_i32_0 : i32
    scf.if %2 {
      %cst_11 = arith.constant 0.000000e+00 : f32
      %34 = vector.broadcast %cst_11 : f32 to vector<8x128xf32>
      %c0_12 = arith.constant 0 : index
      %c0_13 = arith.constant 0 : index
      %c0_14 = arith.constant 0 : index
      %35 = vector.load %arg4[%c0_12, %c0_13, %c0_14] : memref<1x8x128xf32, #tpu.memory_space<vmem>>, vector<1x8x128xf32>
      %36 = vector.shape_cast %35 : vector<1x8x128xf32> to vector<8x128xf32>
      %37 = vector.shape_cast %34 : vector<8x128xf32> to vector<1x8x128xf32>
      tpu.vector_store %arg4[%c0_12, %c0_13, %c0_14], %37 {strides = array<i32>} : memref<1x8x128xf32, #tpu.memory_space<vmem>>, vector<1x8x128xf32>,
    } else {
    }
    %c0 = arith.constant 0 : index
    %c0_1 = arith.constant 0 : index
    %3 = vector.load %arg2[%c0, %c0_1] : memref<8x128xf32, #tpu.memory_space<vmem>>, vector<8x128xf32>
    %c0_2 = arith.constant 0 : index
    %c0_3 = arith.constant 0 : index
    %4 = vector.load %arg3[%c0_2, %c0_3] : memref<8x128xf32, #tpu.memory_space<vmem>>, vector<8x128xf32>
    %5 = math.absf %3 : vector<8x128xf32>
    %cst = arith.constant 0.000000e+00 : f32
    %6 = vector.broadcast %cst : f32 to vector<8x128xf32>
    %7 = arith.subf %6, %5 : vector<8x128xf32>
    %8 = math.exp %7 : vector<8x128xf32>
    %cst_4 = arith.constant 0.000000e+00 : f32
    %9 = vector.broadcast %cst_4 : f32 to vector<8x128xf32>
    %10 = arith.maximumf %3, %9 : vector<8x128xf32>
    %11 = arith.mulf %3, %4 : vector<8x128xf32>
    %12 = arith.subf %10, %11 : vector<8x128xf32>
    %13 = math.log1p %8 : vector<8x128xf32>
    %14 = arith.addf %12, %13 : vector<8x128xf32>
    %cst_5 = arith.constant 0.000000e+00 : f32
    %15 = vector.broadcast %cst_5 : f32 to vector<8x128xf32>
    %16 = arith.subf %15, %14 : vector<8x128xf32>
    %17 = math.exp %16 : vector<8x128xf32>
    %cst_6 = arith.constant 1.000000e+00 : f32
    %18 = vector.broadcast %cst_6 : f32 to vector<8x128xf32>
    %19 = arith.subf %18, %17 : vector<8x128xf32>
    %20 = arith.mulf %19, %19 : vector<8x128xf32>
    %cst_7 = arith.constant 7.500000e-01 : f32
    %21 = vector.broadcast %cst_7 : f32 to vector<8x128xf32>
    %22 = arith.mulf %21, %20 : vector<8x128xf32>
    %23 = arith.mulf %22, %14 : vector<8x128xf32>
    %c1_i32 = arith.constant 1 : i32
    %24 = arith.muli %arg0, %c1_i32 : i32
    %25 = arith.addi %24, %arg1 : i32
    %c1024_i32 = arith.constant 1024 : i32
    %26 = arith.muli %25, %c1024_i32 : i32
    %c1024_i32_8 = arith.constant 1024 : i32
    %27 = arith.addi %26, %c1024_i32_8 : i32
    %c512_i32 = arith.constant 512 : i32
    %28 = arith.cmpi sle, %27, %c512_i32 : i32
    %29 = arith.extui %28 : i1 to i32
    %c0_i32_9 = arith.constant 0 : i32
    %30 = arith.cmpi ne, %29, %c0_i32_9 : i32
    scf.if %30 {
      %c0_11 = arith.constant 0 : index
      %c0_12 = arith.constant 0 : index
      %c0_13 = arith.constant 0 : index
      %34 = vector.load %arg4[%c0_11, %c0_12, %c0_13] : memref<1x8x128xf32, #tpu.memory_space<vmem>>, vector<1x8x128xf32>
      %35 = vector.shape_cast %34 : vector<1x8x128xf32> to vector<8x128xf32>
      %36 = vector.shape_cast %23 : vector<8x128xf32> to vector<1x8x128xf32>
      %cst_14 = arith.constant dense<0.000000e+00> : vector<8x128xf32>
      %37 = vector.multi_reduction <add>, %36, %cst_14 [0] : vector<1x8x128xf32> to vector<8x128xf32>
      %38 = arith.addf %35, %37 : vector<8x128xf32>
      %c0_15 = arith.constant 0 : index
      %c0_16 = arith.constant 0 : index
      %c0_17 = arith.constant 0 : index
      %39 = vector.load %arg4[%c0_15, %c0_16, %c0_17] : memref<1x8x128xf32, #tpu.memory_space<vmem>>, vector<1x8x128xf32>
      %40 = vector.shape_cast %39 : vector<1x8x128xf32> to vector<8x128xf32>
      %41 = vector.shape_cast %38 : vector<8x128xf32> to vector<1x8x128xf32>
      tpu.vector_store %arg4[%c0_15, %c0_16, %c0_17], %41 {strides = array<i32>} : memref<1x8x128xf32, #tpu.memory_space<vmem>>, vector<1x8x128xf32>,
    } else {
    }
    %true = arith.constant true
    %31 = arith.xori %28, %true : i1
    %32 = arith.extui %31 : i1 to i32
    %c0_i32_10 = arith.constant 0 : i32
    %33 = arith.cmpi ne, %32, %c0_i32_10 : i32
    scf.if %33 {
      %34 = tpu.iota {dimensions = array<i32: 0>} : vector<8x128xi32>
      %35 = tpu.iota {dimensions = array<i32: 1>} : vector<8x128xi32>
      %c128_i32 = arith.constant 128 : i32
      %36 = vector.broadcast %c128_i32 : i32 to vector<8x128xi32>
      %37 = arith.muli %34, %36 : vector<8x128xi32>
      %38 = vector.broadcast %26 : i32 to vector<8x128xi32>
      %39 = arith.addi %38, %37 : vector<8x128xi32>
      %40 = arith.addi %39, %35 : vector<8x128xi32>
      %c512_i32_11 = arith.constant 512 : i32
      %41 = vector.broadcast %c512_i32_11 : i32 to vector<8x128xi32>
      %42 = arith.cmpi slt, %40, %41 : vector<8x128xi32>
      %cst_12 = arith.constant 0.000000e+00 : f32
      %43 = vector.broadcast %cst_12 : f32 to vector<8x128xf32>
      %44 = arith.select %42, %23, %43 : vector<8x128xi1>, vector<8x128xf32>
      %c0_13 = arith.constant 0 : index
      %c0_14 = arith.constant 0 : index
      %c0_15 = arith.constant 0 : index
      %45 = vector.load %arg4[%c0_13, %c0_14, %c0_15] : memref<1x8x128xf32, #tpu.memory_space<vmem>>, vector<1x8x128xf32>
      %46 = vector.shape_cast %45 : vector<1x8x128xf32> to vector<8x128xf32>
      %47 = vector.shape_cast %44 : vector<8x128xf32> to vector<1x8x128xf32>
      %cst_16 = arith.constant dense<0.000000e+00> : vector<8x128xf32>
      %48 = vector.multi_reduction <add>, %47, %cst_16 [0] : vector<1x8x128xf32> to vector<8x128xf32>
      %49 = arith.addf %46, %48 : vector<8x128xf32>
      %c0_17 = arith.constant 0 : index
      %c0_18 = arith.constant 0 : index
      %c0_19 = arith.constant 0 : index
      %50 = vector.load %arg4[%c0_17, %c0_18, %c0_19] : memref<1x8x128xf32, #tpu.memory_space<vmem>>, vector<1x8x128xf32>
      %51 = vector.shape_cast %50 : vector<1x8x128xf32> to vector<8x128xf32>
      %52 = vector.shape_cast %49 : vector<8x128xf32> to vector<1x8x128xf32>
      tpu.vector_store %arg4[%c0_17, %c0_18, %c0_19], %52 {strides = array<i32>} : memref<1x8x128xf32, #tpu.memory_space<vmem>>, vector<1x8x128xf32>,
    } else {
    }
    return
  }
  func.func @transform_0(%arg0: i32, %arg1: i32) -> (i32, i32) {
    %c1_i32 = arith.constant 1 : i32
    %0 = arith.muli %arg0, %c1_i32 : i32
    %1 = arith.addi %0, %arg1 : i32
    %c0_i32 = arith.constant 0 : i32
    %c0_i32_0 = arith.constant 0 : i32
    return %1, %c0_i32 : i32, i32
  }
  func.func @transform_1(%arg0: i32, %arg1: i32) -> (i32, i32) {
    %c1_i32 = arith.constant 1 : i32
    %0 = arith.muli %arg0, %c1_i32 : i32
    %1 = arith.addi %0, %arg1 : i32
    %c0_i32 = arith.constant 0 : i32
    %c0_i32_0 = arith.constant 0 : i32
    return %1, %c0_i32 : i32, i32
  }
  func.func @transform_2(%arg0: i32, %arg1: i32) -> (i32, i32, i32) {
    %c0_i32 = arith.constant 0 : i32
    %c0_i32_0 = arith.constant 0 : i32
    %c0_i32_1 = arith.constant 0 : i32
    return %arg0, %c0_i32, %c0_i32_0 : i32, i32, i32
  }
}

</mosaic_0001>

<llo_original>
// kernel: tpu_custom_call.1
$region0: #{tpu_custom_call.1}
  #allocation0 [shape = 'u32[]', space=smem, size = 0x4, offset = 0x4, fixed_abs, tag = 'smem constant byte address 0x4 - core index']
  #allocation1 [shape = 'u32[144,128]{1,0:T(1,128)}', space=vmem, size = 0x12000, scoped, tag = 'internal scratch']
  %s0 = inlined_call_operand.hbm [shape: f32[4,128], index: 0, kind: input, shape index: {}]
  %s1 = inlined_call_operand.hbm [shape: f32[4,128], index: 1, kind: input, shape index: {}]
  %s2 = inlined_call_operand.hbm [shape: f32[1,8,128], index: 2, kind: output, shape index: {}]
  %s3 = sld [smem:[#allocation0]]
  $region38: #{tpu_custom_call.1} parent=0
    _
  %s5 = ssub.s32 1, %s3
  %s6 = scalar_select 0, %s5, %s3
  $region1: #{tpu_custom_call.1} parent=0
    #allocation2 [shape = 'u8[4096]{0}', space=vmem, size = 0x1000, scoped, tag = 'input window, operand 0, single buffered']
    #allocation3 [shape = 's32[1]{0}', space=sflag, size = 0x4, scoped, tag = 'scoped memory for tpu_custom_call.1']
    #allocation4 [shape = 's32[1]{0}', space=sflag, size = 0x4, scoped, tag = 'scoped memory for tpu_custom_call.1']
    #allocation5 [shape = 'u8[4096]{0}', space=vmem, size = 0x1000, scoped, tag = 'input window, operand 1, single buffered']
    #allocation6 [shape = 's32[1]{0}', space=sflag, size = 0x4, scoped, tag = 'scoped memory for tpu_custom_call.1']
    #allocation7 [shape = 'u8[4096]{0}', space=vmem, size = 0x1000, scoped, tag = 'output window, operand 0, single buffered']
    %7 = vsyncpa [#allocation3], 0
    %8 = vsyncpa [#allocation6], 0
    %9 = vsyncpa [#allocation4], 0
    // Predicated region
    $region2: #{tpu_custom_call.1} parent=1 // pred_check
      _
    $region3: #{tpu_custom_call.1} parent=1 // pred_check_branch
      %11 = sbr.rel (0) target = $region5
    $region4: #{tpu_custom_call.1} parent=1 // pred_region
      %s12 = sadd.s32 0, 0
      %s13 = smul.u32 2, %s12
      %s14 = ssub.s32 1, %s13
      %s15 = smul.u32 64, %s14
      %s17 = ssub.s32 128, %s15
      %18 = vsyncadd [#allocation3], %s17
      %p19 = scmp.ne.s32.totalorder 0, %s15
      %s20 = smul.addr %s13, 64
      %s21 = scalar_lea.hbm %s0, %s20
      %s22 = smul.u32 4, %s14
      %s23 = sshll.u32 [#allocation2], 4
      %s24 = int_to_ptr.vmem [resolvable:$true] %s23
      %s25 = sshll.u32 %s22, 4
      %29 = dma.hbm_to_vmem [thread:$0]  (%p19), %s21, %s25, %s24, [#allocation3], 64, 64, 4
    $region5: #{tpu_custom_call.1} parent=1 // pred_fallthru
      _
    // Predicated region
    $region6: #{tpu_custom_call.1} parent=1 // pred_check
      _
    $region7: #{tpu_custom_call.1} parent=1 // pred_check_branch
      %31 = sbr.rel (0) target = $region9
    $region8: #{tpu_custom_call.1} parent=1 // pred_region
      %s32 = sadd.s32 0, 0
      %s33 = smul.u32 2, %s32
      %s34 = ssub.s32 1, %s33
      %s35 = smul.u32 64, %s34
      %s37 = ssub.s32 128, %s35
      %38 = vsyncadd [#allocation6], %s37
      %p39 = scmp.ne.s32.totalorder 0, %s35
      %s40 = smul.addr %s33, 64
      %s41 = scalar_lea.hbm %s1, %s40
      %s42 = smul.u32 4, %s34
      %s43 = sshll.u32 [#allocation5], 4
      %s44 = int_to_ptr.vmem [resolvable:$true] %s43
      %s45 = sshll.u32 %s42, 4
      %49 = dma.hbm_to_vmem [thread:$0]  (%p39), %s41, %s45, %s44, [#allocation6], 64, 64, 4
    $region9: #{tpu_custom_call.1} parent=1 // pred_fallthru
      _
    // Predicated region
    $region10: #{tpu_custom_call.1} parent=1 // pred_check
      _
    $region11: #{tpu_custom_call.1} parent=1 // pred_check_branch
      %51 = sbr.rel (0) target = $region13
    $region12: #{tpu_custom_call.1} parent=1 // pred_region
      %52 = dma.done [#allocation3], 128
    $region13: #{tpu_custom_call.1} parent=1 // pred_fallthru
      _
    // Predicated region
    $region14: #{tpu_custom_call.1} parent=1 // pred_check
      _
    $region15: #{tpu_custom_call.1} parent=1 // pred_check_branch
      %54 = sbr.rel (0) target = $region17
    $region16: #{tpu_custom_call.1} parent=1 // pred_region
      %55 = dma.done [#allocation6], 128
    $region17: #{tpu_custom_call.1} parent=1 // pred_fallthru
      _
    %s56 = sadd.s32 0, 0
    %s57 = smul.u32 2, %s56
    %s58 = ssub.s32 1, %s57
    %s59 = smul.u32 64, %s58
    %s60 = sadd.s32 0, 0
    %s61 = smul.u32 2, %s60
    %s62 = ssub.s32 1, %s61
    %s63 = smul.u32 64, %s62
    %p64 = scmp.eq.s32.totalorder 0, 0
    // Predicated region
    $region18: #{tpu_custom_call.1} parent=1 // pred_check
      %p65 = pneg %p64
    $region19: #{tpu_custom_call.1} parent=1 // pred_check_branch
      %67 = sbr.rel (%p65) target = $region21
    $region20: #{tpu_custom_call.1} parent=1 // pred_region
      %68 = vst [vmem:[#allocation7] sm:$0xff] 0.0
    $region21: #{tpu_custom_call.1} parent=1 // pred_fallthru
      _
    %v69 = vld [vmem:[#allocation2] sm:$0xff]
    %v70 = vld [vmem:[#allocation5] sm:$0xff]
    %v71 = vand.u32 2147483647, %v69
    %v72 = vsub.f32 0.0, %v71
    %v73 = vmul.f32 %v72, 1.442695
    %v74 = vpow.pop %v73
    %v75 = vmax.f32 %v69, 0.0
    %v76 = vmul.f32 %v69, %v70
    %v77 = vsub.f32 %v75, %v76
    %v78 = vadd.f32 %v74, 1.0
    %v79 = vlog2.pop %v78
    %v80 = vmul.f32 %v79, 0.6931472
    %v81 = vmul.f32 -0.5, %v74
    %v82 = vadd.f32 %v81, 1.0
    %v83 = vmul.f32 %v82, %v74
    %v84 = vand.u32 2147483647, %v74
    %vm85 = vcmp.lt.f32.partialorder %v84, 0.0004427343
    %v86 = vsel %vm85, %v83, %v80
    %v87 = vadd.f32 %v77, %v86
    %v88 = vsub.f32 0.0, %v87
    %v89 = vmul.f32 %v88, 1.442695
    %v90 = vpow.pop %v89
    %v91 = vsub.f32 1.0, %v90
    %v92 = vmul.f32 %v91, %v91
    %v93 = vmul.f32 %v92, 0.75
    %v94 = vmul.f32 %v93, %v87
    %s95 = sadd.s32 0, 0
    %s96 = smul.u32 %s95, 1024
    %s97 = sadd.s32 %s96, 1024
    %p98 = scmp.le.s32.totalorder %s97, 512
    // Predicated region
    $region22: #{tpu_custom_call.1} parent=1 // pred_check
      %p99 = pneg %p98
    $region23: #{tpu_custom_call.1} parent=1 // pred_check_branch
      %101 = sbr.rel (%p99) target = $region25
    $region24: #{tpu_custom_call.1} parent=1 // pred_region
      %v102 = vld [vmem:[#allocation7] sm:$0xff]
      %v103 = vadd.f32 %v94, 0.0
      %v104 = vadd.f32 %v102, %v103
      %105 = vst [vmem:[#allocation7] sm:$0xff] %v104
    $region25: #{tpu_custom_call.1} parent=1 // pred_fallthru
      _
    %p106 = scmp.gt.s32.totalorder %s97, 512
    // Predicated region
    $region26: #{tpu_custom_call.1} parent=1 // pred_check
      %p107 = pneg %p106
    $region27: #{tpu_custom_call.1} parent=1 // pred_check_branch
      %109 = sbr.rel (%p107) target = $region29
    $region28: #{tpu_custom_call.1} parent=1 // pred_region
      %v110 = vlaneseq
      %v111 = vshrl.u32 %v110, 7
      %v112 = vlaneseq
      %v113 = vand.u32 %v112, 127
      %v114 = vmul.u32 %v111, 128
      %v115 = vstv %s96
      %v116 = vadd.s32 %v115, %v114
      %v117 = vadd.s32 %v116, %v113
      %vm118 = vcmp.lt.s32.totalorder %v117, 512
      %v119 = vsel %vm118, %v94, 0.0
      %v120 = vld [vmem:[#allocation7] sm:$0xff]
      %v121 = vadd.f32 %v119, 0.0
      %v122 = vadd.f32 %v120, %v121
      %123 = vst [vmem:[#allocation7] sm:$0xff] %v122
    $region29: #{tpu_custom_call.1} parent=1 // pred_fallthru
      _
    // Predicated region
    $region30: #{tpu_custom_call.1} parent=1 // pred_check
      _
    $region31: #{tpu_custom_call.1} parent=1 // pred_check_branch
      %125 = sbr.rel (0) target = $region33
    $region32: #{tpu_custom_call.1} parent=1 // pred_region
      %s127 = ssub.s32 128, 128
      %128 = vsyncadd [#allocation4], %s127
      %s130 = sshll.u32 [#allocation7], 4
      %s131 = int_to_ptr.vmem [resolvable:$true] %s130
      %133 = dma.vmem_to_hbm [thread:$0]  %s131, 128, %s2, [#allocation4]
    $region33: #{tpu_custom_call.1} parent=1 // pred_fallthru
      _
    // Predicated region
    $region34: #{tpu_custom_call.1} parent=1 // pred_check
      _
    $region35: #{tpu_custom_call.1} parent=1 // pred_check_branch
      %135 = sbr.rel (0) target = $region37
    $region36: #{tpu_custom_call.1} parent=1 // pred_region
      %136 = dma.done [#allocation4], 128
    $region37: #{tpu_custom_call.1} parent=1 // pred_fallthru
      _
    %137 = vsyncpa [#allocation3], 1
    %138 = vsyncpa [#allocation6], 1
    %139 = vsyncpa [#allocation4], 1

</llo_original>
